<compile_context>
chip_gen: v6e
topology: v6e:2x2x1
jax: 0.10.0
libtpu: 0.0.40
codegen_flags: <defaults>
</compile_context>

<pallas_src>
import jax
import jax.numpy as jnp
from jax.experimental import pallas as pl
from jax.experimental.pallas import tpu as pltpu


def _round_up(n: int, m: int) -> int:
    return ((n + m - 1) // m) * m


def base_network_kernel(x_ref, w_ref, b_ref, o_ref):
    # x_ref: (TB, Dp) VMEM   w_ref: (1, Dp) VMEM   b_ref: (1,) SMEM   o_ref: (TB, 1)
    prod = x_ref[...] * w_ref[...]                       # VPU broadcast multiply
    energy = jnp.sum(prod, axis=-1, keepdims=True)       # XLU lane reduction -> (TB, 1)
    energy = energy + b_ref[0]                           # scalar bias from SMEM
    o_ref[...] = jnp.maximum(energy, 0.0).astype(o_ref.dtype)


def base_network_forward(x, w, b, *, tile_rows: int = 512):
    """x: (B, D) f32, w: (1, D) f32 (PyTorch layout), b: (1,) f32 -> (B, 1) f32."""
    B, D = x.shape

    # Lane-dense feature axis (multiple of 128); zero padding is exact for a dot.
    Dp = _round_up(max(D, 1), 128)

    # Batch tile: multiple of 8 (sublanes), capped so 2 * TB * Dp * 4B (double
    # buffering of x) fits the smallest default scoped VMEM (v5e: 16 MiB).
    vmem_budget = 12 * 1024 * 1024
    tb_cap = max(8, ((vmem_budget // (2 * Dp * 4)) // 8) * 8)
    tb = min(max(8, (tile_rows // 8) * 8), tb_cap, _round_up(B, 8))
    Bp = _round_up(B, tb)

    # Pad inputs (zeros contribute nothing to the reduction).
    if Bp != B or Dp != D:
        xp = jnp.zeros((Bp, Dp), x.dtype).at[:B, :D].set(x)
    else:
        xp = x
    wp = jnp.zeros((1, Dp), w.dtype).at[:, :D].set(w) if Dp != D else w

    grid = (Bp // tb,)

    out = pl.pallas_call(
        base_network_kernel,
        out_shape=jax.ShapeDtypeStruct((Bp, 1), x.dtype),
        grid_spec=pl.GridSpec(
            grid=grid,
            in_specs=[
                pl.BlockSpec((tb, Dp), lambda i: (i, 0)),                  # x tile
                pl.BlockSpec((1, Dp), lambda i: (0, 0)),                   # weight row
                pl.BlockSpec(memory_space=pltpu.MemorySpace.SMEM),         # bias scalar
            ],
            out_specs=pl.BlockSpec((tb, 1), lambda i: (i, 0)),
        ),
        compiler_params=pltpu.CompilerParams(
            dimension_semantics=("parallel",),
        ),
        cost_estimate=pl.CostEstimate(
            flops=2 * Bp * Dp,
            transcendentals=0,
            bytes_accessed=4 * (Bp * Dp + Dp + Bp),
        ),
    )(xp, wp, b)

    return out[:B]


def init_params(key, input_size):
    # Deterministic init matching nn.Linear's default U(-1/sqrt(in), 1/sqrt(in)).
    k_w, k_b = jax.random.split(key)
    bound = 1.0 / jnp.sqrt(jnp.float32(input_size))
    w = jax.random.uniform(k_w, (1, input_size), jnp.float32, -bound, bound)  # PyTorch layout
    b = jax.random.uniform(k_b, (1,), jnp.float32, -bound, bound)
    return w, b


def reference_forward(x, w, b):
    return jnp.maximum(x @ w.T + b, 0.0)


if __name__ == "__main__":
    key = jax.random.PRNGKey(0)
    k_x, k_p = jax.random.split(key)

    batch, input_size = 8, 32
    x = jax.random.normal(k_x, (batch, input_size), jnp.float32)
    w, b = init_params(k_p, input_size)

    out = base_network_forward(x, w, b)
    out = jax.block_until_ready(out)

    ref = reference_forward(x, w, b)
    assert out.shape == (batch, 1), out.shape
    assert jnp.allclose(out, ref, atol=1e-5, rtol=1e-5)

    print("KERNEL_OK")
</pallas_src>

<mosaic_0001>
module attributes {stable_mosaic.version = 11 : i64} {
  func.func @base_network_kernel(%arg0: i32, %arg1: memref<8x128xf32, #tpu.memory_space<vmem>>, %arg2: memref<1x128xf32, #tpu.memory_space<vmem>>, %arg3: memref<1xf32, #tpu.memory_space<smem>>, %arg4: memref<8x1xf32, #tpu.memory_space<vmem>>) attributes {dimension_semantics = [#tpu.dimension_semantics<parallel>], iteration_bounds = array<i64: 1>, scalar_prefetch = 0 : i64, scratch_operands = 0 : i64, tpu.core_type = #tpu.core_type<tc>, window_params = [{transform_indices = @transform_0, window_bounds = array<i64: 8, 128>}, {pipeline_mode = #tpu.pipeline_mode<synchronous>, transform_indices = @transform_1, window_bounds = array<i64: 1, 128>}, {transform_indices = @transform_2, window_bounds = array<i64: 1>}, {transform_indices = @transform_3, window_bounds = array<i64: 8, 1>}]} {
    %c0 = arith.constant 0 : index
    %c0_0 = arith.constant 0 : index
    %0 = vector.load %arg1[%c0, %c0_0] : memref<8x128xf32, #tpu.memory_space<vmem>>, vector<8x128xf32>
    %c0_1 = arith.constant 0 : index
    %c0_2 = arith.constant 0 : index
    %1 = vector.load %arg2[%c0_1, %c0_2] : memref<1x128xf32, #tpu.memory_space<vmem>>, vector<1x128xf32>
    %2 = vector.broadcast %1 : vector<1x128xf32> to vector<8x128xf32>
    %3 = arith.mulf %0, %2 : vector<8x128xf32>
    %cst = arith.constant dense<0.000000e+00> : vector<8xf32>
    %4 = vector.multi_reduction <add>, %3, %cst [1] : vector<8x128xf32> to vector<8xf32>
    %5 = vector.shape_cast %4 : vector<8xf32> to vector<8x1xf32>
    %c0_3 = arith.constant 0 : index
    %6 = memref.load %arg3[%c0_3] : memref<1xf32, #tpu.memory_space<smem>>
    %7 = vector.broadcast %6 : f32 to vector<8x1xf32>
    %8 = arith.addf %5, %7 : vector<8x1xf32>
    %cst_4 = arith.constant 0.000000e+00 : f32
    %9 = vector.broadcast %cst_4 : f32 to vector<8x1xf32>
    %10 = arith.maximumf %8, %9 : vector<8x1xf32>
    %c0_5 = arith.constant 0 : index
    %c0_6 = arith.constant 0 : index
    %11 = vector.load %arg4[%c0_5, %c0_6] : memref<8x1xf32, #tpu.memory_space<vmem>>, vector<8x1xf32>
    tpu.vector_store %arg4[%c0_5, %c0_6], %10 {strides = array<i32>} : memref<8x1xf32, #tpu.memory_space<vmem>>, vector<8x1xf32>,
    return
  }
  func.func @transform_0(%arg0: i32) -> (i32, i32) {
    %c0_i32 = arith.constant 0 : i32
    %c0_i32_0 = arith.constant 0 : i32
    return %arg0, %c0_i32 : i32, i32
  }
  func.func @transform_1(%arg0: i32) -> (i32, i32) {
    %c0_i32 = arith.constant 0 : i32
    %c0_i32_0 = arith.constant 0 : i32
    %c0_i32_1 = arith.constant 0 : i32
    return %c0_i32, %c0_i32_0 : i32, i32
  }
  func.func @transform_2(%arg0: i32) -> i32 {
    %c0_i32 = arith.constant 0 : i32
    %c0_i32_0 = arith.constant 0 : i32
    return %c0_i32 : i32
  }
  func.func @transform_3(%arg0: i32) -> (i32, i32) {
    %c0_i32 = arith.constant 0 : i32
    %c0_i32_0 = arith.constant 0 : i32
    return %arg0, %c0_i32 : i32, i32
  }
}

</mosaic_0001>

<llo_original>
// kernel: tpu_custom_call.1
$region0: #{tpu_custom_call.1}
  #allocation0 [shape = 'u32[]', space=smem, size = 0x4, offset = 0x4, fixed_abs, tag = 'smem constant byte address 0x4 - core index']
  #allocation1 [shape = 'u32[144,128]{1,0:T(1,128)}', space=vmem, size = 0x12000, scoped, tag = 'internal scratch']
  #allocation2 [shape = 'f32[1]{0:T(128)S(6)}', space=smem, size = 0x200, scoped, tag = 'scoped memory for tpu_custom_call.1']
  %s0 = inlined_call_operand.hbm [shape: f32[8,128], index: 0, kind: input, shape index: {}]
  %s1 = inlined_call_operand.vmem [shape: f32[1,128], index: 1, kind: input, shape index: {}]
  %s2 = inlined_call_operand.<no memory space> [shape: f32[1], index: 2, kind: input, shape index: {}]
  %s3 = inlined_call_operand.vmem [shape: f32[8,1], index: 3, kind: output, shape index: {}]
  %s4 = sld [smem:[#allocation0]]
  $region26: #{tpu_custom_call.1} parent=0
    _
  %s6 = ssub.s32 1, %s4
  %s7 = scalar_select 0, %s6, %s4
  %8 = sst [smem:[#allocation2]] %s2
  $region1: #{tpu_custom_call.1} parent=0
    #allocation3 [shape = 'u8[4096]{0}', space=vmem, size = 0x1000, scoped, tag = 'input window, operand 0, single buffered']
    #allocation4 [shape = 's32[1]{0}', space=sflag, size = 0x4, scoped, tag = 'scoped memory for tpu_custom_call.1']
    %9 = vsyncpa [#allocation4], 0
    // Predicated region
    $region2: #{tpu_custom_call.1} parent=1 // pred_check
      _
    $region3: #{tpu_custom_call.1} parent=1 // pred_check_branch
      %11 = sbr.rel (0) target = $region5
    $region4: #{tpu_custom_call.1} parent=1 // pred_region
      %s13 = ssub.s32 128, 128
      %14 = vsyncadd [#allocation4], %s13
      %s16 = sshll.u32 [#allocation3], 4
      %s17 = int_to_ptr.vmem [resolvable:$true] %s16
      %19 = dma.hbm_to_vmem [thread:$0]  %s0, 128, %s17, [#allocation4]
    $region5: #{tpu_custom_call.1} parent=1 // pred_fallthru
      _
    // Predicated region
    $region6: #{tpu_custom_call.1} parent=1 // pred_check
      _
    $region7: #{tpu_custom_call.1} parent=1 // pred_check_branch
      %21 = sbr.rel (0) target = $region9
    $region8: #{tpu_custom_call.1} parent=1 // pred_region
      _
    $region9: #{tpu_custom_call.1} parent=1 // pred_fallthru
      _
    // Predicated region
    $region10: #{tpu_custom_call.1} parent=1 // pred_check
      _
    $region11: #{tpu_custom_call.1} parent=1 // pred_check_branch
      %23 = sbr.rel (0) target = $region13
    $region12: #{tpu_custom_call.1} parent=1 // pred_region
      _
    $region13: #{tpu_custom_call.1} parent=1 // pred_fallthru
      _
    // Predicated region
    $region14: #{tpu_custom_call.1} parent=1 // pred_check
      _
    $region15: #{tpu_custom_call.1} parent=1 // pred_check_branch
      %25 = sbr.rel (0) target = $region17
    $region16: #{tpu_custom_call.1} parent=1 // pred_region
      %26 = dma.done [#allocation4], 128
    $region17: #{tpu_custom_call.1} parent=1 // pred_fallthru
      _
    %v27 = vld [vmem:[#allocation3] sm:$0xff]
    %v28 = vld [vmem:[%s1] sm:$0x1]
    %v30 = vlaneseq
    %v31 = vshrl.u32 %v30, 7
    %v32 = vsub.s32 0, %v31
    %v33 = vrot.slane %v28, %v32
    %v35 = vmul.f32 %v27, %v33
    %36 = vadd.xlane.f32.xlu0 %v35
    %v37 = vpop.xlane.xlu0 %36
    %s38 = sld [smem:[#allocation2]]
    %v39 = vstv %s38
    %v40 = vadd.f32 %v37, %v39
    %v41 = vmax.f32 %v40, 0.0
    %vm42 = vcmask 7168
    %43 = vst.msk [vmem:[%s3] sm:$0xff] %vm42, %v41
    // Predicated region
    $region18: #{tpu_custom_call.1} parent=1 // pred_check
      _
    $region19: #{tpu_custom_call.1} parent=1 // pred_check_branch
      %45 = sbr.rel (0) target = $region21
    $region20: #{tpu_custom_call.1} parent=1 // pred_region
      _
    $region21: #{tpu_custom_call.1} parent=1 // pred_fallthru
      _
    // Predicated region
    $region22: #{tpu_custom_call.1} parent=1 // pred_check
      _
    $region23: #{tpu_custom_call.1} parent=1 // pred_check_branch
      %47 = sbr.rel (0) target = $region25
    $region24: #{tpu_custom_call.1} parent=1 // pred_region
      _
    $region25: #{tpu_custom_call.1} parent=1 // pred_fallthru
      _
    %48 = vsyncpa [#allocation4], 1

</llo_original>
